<compile_context>
chip_gen: v7x
topology: tpu7x:2x2x1
jax: 0.10.0
libtpu: 0.0.40
codegen_flags: <defaults>
</compile_context>

<pallas_src>
import functools
import math

import jax
import jax.numpy as jnp
from jax.experimental import pallas as pl
from jax.experimental.pallas import tpu as pltpu


# --------------------------- kernels ---------------------------

def ffn_fused_kernel(x_ref, w1_ref, b1_ref, w2_ref, b2_ref, o_ref):
    """Weights fully VMEM-resident: one (TM, C) row tile -> full FFN."""
    h = jnp.dot(x_ref[...], w1_ref[...],
                preferred_element_type=jnp.float32) + b1_ref[...]
    h = jnp.maximum(h, 0.0).astype(jnp.bfloat16)      # bf16 into the 2nd MXU pass
    y = jnp.dot(h, w2_ref[...],
                preferred_element_type=jnp.float32) + b2_ref[...]
    o_ref[...] = y.astype(o_ref.dtype)


def ffn_reduce_kernel(x_ref, w1_ref, b1_ref, w2_ref, b2_ref, o_ref):
    """Large-d_ff fallback: d_ff is the (last) reduction grid axis.

    The output block index is constant across j, so o_ref stays resident in
    VMEM across the reduction and serves as the f32 accumulator directly.
    """
    j = pl.program_id(1)

    @pl.when(j == 0)
    def _():
        o_ref[...] = jnp.zeros_like(o_ref)

    h = jnp.dot(x_ref[...], w1_ref[...],
                preferred_element_type=jnp.float32) + b1_ref[...]
    h = jnp.maximum(h, 0.0).astype(jnp.bfloat16)
    o_ref[...] += jnp.dot(h, w2_ref[...], preferred_element_type=jnp.float32)

    @pl.when(j == pl.num_programs(1) - 1)
    def _():
        o_ref[...] += b2_ref[...]


# --------------------------- wrapper ---------------------------

def _buffered_weight_spec(block_shape, index_map):
    """Triple-buffered weight BlockSpec; falls back gracefully if unsupported."""
    try:
        return pl.BlockSpec(block_shape, index_map, pipeline_mode=pl.Buffered(3))
    except (TypeError, AttributeError):
        return pl.BlockSpec(block_shape, index_map)


def positionwise_ffn(x, w1, b1, w2, b2, *, tm=512, tdff=None,
                     resident_weight_bytes=8 * 1024 * 1024):
    """y = relu(x @ w1 + b1) @ w2 + b2 over the last dim of x.

    x: [..., d_model]; w1: [d_model, d_ff]; w2: [d_ff, d_model].
    """
    orig_shape = x.shape
    orig_dtype = x.dtype
    C = orig_shape[-1]
    Dff = w1.shape[1]
    R = math.prod(orig_shape[:-1])

    # bf16 operands for the MXU, f32 biases added to the f32 accumulators.
    xf = x.reshape(R, C).astype(jnp.bfloat16)
    w1b = w1.astype(jnp.bfloat16)
    w2b = w2.astype(jnp.bfloat16)
    b1r = b1.reshape(1, Dff).astype(jnp.float32)
    b2r = b2.reshape(1, C).astype(jnp.float32)

    # Row tile: large (amortizes per-step overhead), multiple of 8 sublanes;
    # a single full-R block when R is small.  No wrapper-side padding: Pallas
    # handles the ragged last row block.
    if R <= tm:
        tm = R
    else:
        tm = max(8, (tm // 8) * 8)
    row_tiles = pl.cdiv(R, tm)

    weight_bytes = 2 * (C * Dff + Dff * C)            # bf16 W1 + W2
    flops = 4 * R * C * Dff                           # two matmuls

    if tdff is None and weight_bytes <= resident_weight_bytes:
        # ---- Path A: weights fully VMEM-resident, no reduction grid axis ----
        cost = pl.CostEstimate(
            flops=flops, transcendentals=0,
            bytes_accessed=2 * R * C + weight_bytes + 4 * (Dff + C) + 4 * R * C)
        out = pl.pallas_call(
            ffn_fused_kernel,
            out_shape=jax.ShapeDtypeStruct((R, C), jnp.float32),
            grid_spec=pltpu.PrefetchScalarGridSpec(
                num_scalar_prefetch=0,
                grid=(row_tiles,),
                in_specs=[
                    pl.BlockSpec((tm, C), lambda i: (i, 0)),    # x row tile
                    pl.BlockSpec((C, Dff), lambda i: (0, 0)),   # W1 (resident)
                    pl.BlockSpec((1, Dff), lambda i: (0, 0)),   # b1 (resident)
                    pl.BlockSpec((Dff, C), lambda i: (0, 0)),   # W2 (resident)
                    pl.BlockSpec((1, C), lambda i: (0, 0)),     # b2 (resident)
                ],
                out_specs=pl.BlockSpec((tm, C), lambda i: (i, 0)),
            ),
            compiler_params=pltpu.CompilerParams(
                dimension_semantics=("parallel",),
                vmem_limit_bytes=32 * 1024 * 1024),
            cost_estimate=cost,
        )(xf, w1b, b1r, w2b, b2r)
    else:
        # ---- Path B: very large d_ff — reduce over d_ff tiles (last axis) ----
        if tdff is None:
            tdff = Dff
            for cand in (2048, 1024, 512, 256, 128):
                if Dff % cand == 0:
                    tdff = cand
                    break
        assert Dff % tdff == 0, "tdff must divide d_ff"
        dff_tiles = Dff // tdff
        cost = pl.CostEstimate(
            flops=flops, transcendentals=0,
            bytes_accessed=(2 * R * C + row_tiles * weight_bytes
                            + 4 * (Dff + C) + 4 * R * C))
        out = pl.pallas_call(
            ffn_reduce_kernel,
            out_shape=jax.ShapeDtypeStruct((R, C), jnp.float32),
            grid_spec=pltpu.PrefetchScalarGridSpec(
                num_scalar_prefetch=0,
                grid=(row_tiles, dff_tiles),
                in_specs=[
                    pl.BlockSpec((tm, C), lambda i, j: (i, 0)),      # x rows
                    _buffered_weight_spec((C, tdff), lambda i, j: (0, j)),
                    pl.BlockSpec((1, tdff), lambda i, j: (0, j)),    # b1 slice
                    _buffered_weight_spec((tdff, C), lambda i, j: (j, 0)),
                    pl.BlockSpec((1, C), lambda i, j: (0, 0)),       # b2
                ],
                out_specs=pl.BlockSpec((tm, C), lambda i, j: (i, 0)),
            ),
            compiler_params=pltpu.CompilerParams(
                dimension_semantics=("parallel", "arbitrary"),
                vmem_limit_bytes=32 * 1024 * 1024),
            cost_estimate=cost,
        )(xf, w1b, b1r, w2b, b2r)

    return out.reshape(orig_shape).astype(orig_dtype)


# ---------------- pure-JAX reference (bf16-emulating) ----------------

def positionwise_ffn_ref(x, w1, b1, w2, b2):
    """Reference emulating the kernel numerics: bf16 operands, f32 accumulate."""
    f32 = jnp.float32
    hp = jax.lax.Precision.HIGHEST
    xb = x.astype(jnp.bfloat16).astype(f32)
    w1b = w1.astype(jnp.bfloat16).astype(f32)
    w2b = w2.astype(jnp.bfloat16).astype(f32)
    h = jnp.maximum(jnp.einsum("...c,cf->...f", xb, w1b, precision=hp)
                    + b1.astype(f32), 0.0)
    h = h.astype(jnp.bfloat16).astype(f32)
    y = jnp.einsum("...f,fc->...c", h, w2b, precision=hp) + b2.astype(f32)
    return y.astype(x.dtype)


def make_params(key, d_model, d_ff):
    k1, k2, k3, k4 = jax.random.split(key, 4)
    scale = 0.1
    return {
        "w1": scale * jax.random.normal(k1, (d_model, d_ff), jnp.float32),
        "b1": scale * jax.random.normal(k2, (d_ff,), jnp.float32),
        "w2": scale * jax.random.normal(k3, (d_ff, d_model), jnp.float32),
        "b2": scale * jax.random.normal(k4, (d_model,), jnp.float32),
    }


if __name__ == "__main__":
    # Small shapes consistent with the module: x = [batch, seq, d_model].
    B, T, D_MODEL, D_FF = 2, 16, 128, 512

    key = jax.random.PRNGKey(0)
    kx, kp = jax.random.split(key)
    x = jax.random.normal(kx, (B, T, D_MODEL), jnp.float32)
    p = make_params(kp, D_MODEL, D_FF)

    y_ref = positionwise_ffn_ref(x, p["w1"], p["b1"], p["w2"], p["b2"])

    # Path A: weights VMEM-resident, single grid axis over row tiles.
    run_resident = jax.jit(positionwise_ffn)
    y = jax.block_until_ready(run_resident(x, p["w1"], p["b1"], p["w2"], p["b2"]))
    assert y.shape == x.shape
    assert jnp.allclose(y, y_ref, rtol=2e-3, atol=2e-3), "resident-weight path mismatch"

    # Path B: force the large-d_ff reduction fallback so it is exercised too.
    run_reduce = jax.jit(functools.partial(
        positionwise_ffn, resident_weight_bytes=0, tdff=128))
    y2 = jax.block_until_ready(run_reduce(x, p["w1"], p["b1"], p["w2"], p["b2"]))
    assert jnp.allclose(y2, y_ref, rtol=2e-3, atol=2e-3), "reduction path mismatch"

    print("KERNEL_OK")
</pallas_src>

<mosaic_0001>
module attributes {stable_mosaic.version = 11 : i64} {
  func.func @ffn_fused_kernel(%arg0: i32, %arg1: memref<32x128xbf16, #tpu.memory_space<vmem>>, %arg2: memref<128x512xbf16, #tpu.memory_space<vmem>>, %arg3: memref<1x512xf32, #tpu.memory_space<vmem>>, %arg4: memref<512x128xbf16, #tpu.memory_space<vmem>>, %arg5: memref<1x128xf32, #tpu.memory_space<vmem>>, %arg6: memref<32x128xf32, #tpu.memory_space<vmem>>) attributes {dimension_semantics = [#tpu.dimension_semantics<parallel>], iteration_bounds = array<i64: 1>, scalar_prefetch = 0 : i64, scratch_operands = 0 : i64, tpu.core_type = #tpu.core_type<tc>, window_params = [{transform_indices = @transform_0, window_bounds = array<i64: 32, 128>}, {pipeline_mode = #tpu.pipeline_mode<synchronous>, transform_indices = @transform_1, window_bounds = array<i64: 128, 512>}, {pipeline_mode = #tpu.pipeline_mode<synchronous>, transform_indices = @transform_2, window_bounds = array<i64: 1, 512>}, {pipeline_mode = #tpu.pipeline_mode<synchronous>, transform_indices = @transform_3, window_bounds = array<i64: 512, 128>}, {pipeline_mode = #tpu.pipeline_mode<synchronous>, transform_indices = @transform_4, window_bounds = array<i64: 1, 128>}, {transform_indices = @transform_5, window_bounds = array<i64: 32, 128>}]} {
    %c0 = arith.constant 0 : index
    %c0_0 = arith.constant 0 : index
    %0 = vector.load %arg1[%c0, %c0_0] : memref<32x128xbf16, #tpu.memory_space<vmem>>, vector<32x128xbf16>
    %c0_1 = arith.constant 0 : index
    %c0_2 = arith.constant 0 : index
    %1 = vector.load %arg2[%c0_1, %c0_2] : memref<128x512xbf16, #tpu.memory_space<vmem>>, vector<128x512xbf16>
    %cst = arith.constant dense<0.000000e+00> : vector<32x512xf32>
    %2 = tpu.matmul %0, %1, %cst {dimension_numbers = #tpu.dot_dimension_numbers<[1], [0], [0], [1], [0, 0, 1, 1], [], []>} : vector<32x128xbf16>, vector<128x512xbf16>, vector<32x512xf32> -> vector<32x512xf32>
    %c0_3 = arith.constant 0 : index
    %c0_4 = arith.constant 0 : index
    %3 = vector.load %arg3[%c0_3, %c0_4] : memref<1x512xf32, #tpu.memory_space<vmem>>, vector<1x512xf32>
    %4 = vector.broadcast %3 : vector<1x512xf32> to vector<32x512xf32>
    %5 = arith.addf %2, %4 : vector<32x512xf32>
    %cst_5 = arith.constant 0.000000e+00 : f32
    %6 = vector.broadcast %cst_5 : f32 to vector<32x512xf32>
    %7 = arith.maximumf %5, %6 : vector<32x512xf32>
    %8 = arith.truncf %7 : vector<32x512xf32> to vector<32x512xbf16>
    %c0_6 = arith.constant 0 : index
    %c0_7 = arith.constant 0 : index
    %9 = vector.load %arg4[%c0_6, %c0_7] : memref<512x128xbf16, #tpu.memory_space<vmem>>, vector<512x128xbf16>
    %cst_8 = arith.constant dense<0.000000e+00> : vector<32x128xf32>
    %10 = tpu.matmul %8, %9, %cst_8 {dimension_numbers = #tpu.dot_dimension_numbers<[1], [0], [0], [1], [0, 0, 1, 1], [], []>} : vector<32x512xbf16>, vector<512x128xbf16>, vector<32x128xf32> -> vector<32x128xf32>
    %c0_9 = arith.constant 0 : index
    %c0_10 = arith.constant 0 : index
    %11 = vector.load %arg5[%c0_9, %c0_10] : memref<1x128xf32, #tpu.memory_space<vmem>>, vector<1x128xf32>
    %12 = vector.broadcast %11 : vector<1x128xf32> to vector<32x128xf32>
    %13 = arith.addf %10, %12 : vector<32x128xf32>
    %c0_11 = arith.constant 0 : index
    %c0_12 = arith.constant 0 : index
    %14 = vector.load %arg6[%c0_11, %c0_12] : memref<32x128xf32, #tpu.memory_space<vmem>>, vector<32x128xf32>
    tpu.vector_store %arg6[%c0_11, %c0_12], %13 {strides = array<i32>} : memref<32x128xf32, #tpu.memory_space<vmem>>, vector<32x128xf32>,
    return
  }
  func.func @transform_0(%arg0: i32) -> (i32, i32) {
    %c0_i32 = arith.constant 0 : i32
    %c0_i32_0 = arith.constant 0 : i32
    return %arg0, %c0_i32 : i32, i32
  }
  func.func @transform_1(%arg0: i32) -> (i32, i32) {
    %c0_i32 = arith.constant 0 : i32
    %c0_i32_0 = arith.constant 0 : i32
    %c0_i32_1 = arith.constant 0 : i32
    return %c0_i32, %c0_i32_0 : i32, i32
  }
  func.func @transform_2(%arg0: i32) -> (i32, i32) {
    %c0_i32 = arith.constant 0 : i32
    %c0_i32_0 = arith.constant 0 : i32
    %c0_i32_1 = arith.constant 0 : i32
    return %c0_i32, %c0_i32_0 : i32, i32
  }
  func.func @transform_3(%arg0: i32) -> (i32, i32) {
    %c0_i32 = arith.constant 0 : i32
    %c0_i32_0 = arith.constant 0 : i32
    %c0_i32_1 = arith.constant 0 : i32
    return %c0_i32, %c0_i32_0 : i32, i32
  }
  func.func @transform_4(%arg0: i32) -> (i32, i32) {
    %c0_i32 = arith.constant 0 : i32
    %c0_i32_0 = arith.constant 0 : i32
    %c0_i32_1 = arith.constant 0 : i32
    return %c0_i32, %c0_i32_0 : i32, i32
  }
  func.func @transform_5(%arg0: i32) -> (i32, i32) {
    %c0_i32 = arith.constant 0 : i32
    %c0_i32_0 = arith.constant 0 : i32
    return %arg0, %c0_i32 : i32, i32
  }
}

</mosaic_0001>

<llo_original>
// kernel: positionwise_ffn.1
$region0: #{positionwise_ffn.1}
  #allocation0 [shape = 'u32[]', space=smem, size = 0x4, offset = 0x4, fixed_abs, tag = 'smem constant byte address 0x4 - core index']
  #allocation1 [shape = 'u32[144,128]{1,0:T(1,128)}', space=vmem, size = 0x12000, scoped, tag = 'internal scratch']
  %s0 = inlined_call_operand.vmem [shape: bf16[32,128], index: 0, kind: input, shape index: {}]
  %s1 = inlined_call_operand.vmem [shape: bf16[128,512], index: 1, kind: input, shape index: {}]
  %s2 = inlined_call_operand.vmem [shape: f32[1,512], index: 2, kind: input, shape index: {}]
  %s3 = inlined_call_operand.vmem [shape: bf16[512,128], index: 3, kind: input, shape index: {}]
  %s4 = inlined_call_operand.vmem [shape: f32[1,128], index: 4, kind: input, shape index: {}]
  %s5 = inlined_call_operand.hbm [shape: f32[32,128], index: 5, kind: output, shape index: {}]
  %s6 = sld [smem:[#allocation0]]
  $region30: #{positionwise_ffn.1} parent=0
    _
  %s8 = ssub.s32 1, %s6
  %s9 = scalar_select 0, %s8, %s6
  $region1: #{positionwise_ffn.1} parent=0
    #allocation2 [shape = 'u8[16384]{0}', space=vmem, size = 0x4000, scoped, tag = 'output window, operand 0, single buffered']
    #allocation3 [shape = 's32[1]{0}', space=sflag, size = 0x4, scoped, tag = 'scoped memory for positionwise_ffn.1']
    %10 = vsyncpa [#allocation3], 0
    // Predicated region
    $region2: #{positionwise_ffn.1} parent=1 // pred_check
      _
    $region3: #{positionwise_ffn.1} parent=1 // pred_check_branch
      %12 = sbr.rel (0) target = $region5
    $region4: #{positionwise_ffn.1} parent=1 // pred_region
      _
    $region5: #{positionwise_ffn.1} parent=1 // pred_fallthru
      _
    // Predicated region
    $region6: #{positionwise_ffn.1} parent=1 // pred_check
      _
    $region7: #{positionwise_ffn.1} parent=1 // pred_check_branch
      %14 = sbr.rel (0) target = $region9
    $region8: #{positionwise_ffn.1} parent=1 // pred_region
      _
    $region9: #{positionwise_ffn.1} parent=1 // pred_fallthru
      _
    // Predicated region
    $region10: #{positionwise_ffn.1} parent=1 // pred_check
      _
    $region11: #{positionwise_ffn.1} parent=1 // pred_check_branch
      %16 = sbr.rel (0) target = $region13
    $region12: #{positionwise_ffn.1} parent=1 // pred_region
      _
    $region13: #{positionwise_ffn.1} parent=1 // pred_fallthru
      _
    // Predicated region
    $region14: #{positionwise_ffn.1} parent=1 // pred_check
      _
    $region15: #{positionwise_ffn.1} parent=1 // pred_check_branch
      %18 = sbr.rel (0) target = $region17
    $region16: #{positionwise_ffn.1} parent=1 // pred_region
      _
    $region17: #{positionwise_ffn.1} parent=1 // pred_fallthru
      _
    // Predicated region
    $region18: #{positionwise_ffn.1} parent=1 // pred_check
      _
    $region19: #{positionwise_ffn.1} parent=1 // pred_check_branch
      %20 = sbr.rel (0) target = $region21
    $region20: #{positionwise_ffn.1} parent=1 // pred_region
      _
    $region21: #{positionwise_ffn.1} parent=1 // pred_fallthru
      _
    %v22 = vld [vmem:[%s0] sm:$0xf]
    %v23 = vld [vmem:[%s0 + $0x4] sm:$0xf]
    %v24 = vld [vmem:[%s0 + $0x8] sm:$0xf]
    %v25 = vld [vmem:[%s0 + $0xc] sm:$0xf]
    %v26 = vld [vmem:[%s1] sm:$0xff]
    %v27 = vld [vmem:[%s1 + $0x8] sm:$0xff]
    %v28 = vld [vmem:[%s1 + $0x10] sm:$0xff]
    %v29 = vld [vmem:[%s1 + $0x18] sm:$0xff]
    %v30 = vld [vmem:[%s1 + $0x20] sm:$0xff]
    %v31 = vld [vmem:[%s1 + $0x28] sm:$0xff]
    %v32 = vld [vmem:[%s1 + $0x30] sm:$0xff]
    %v33 = vld [vmem:[%s1 + $0x38] sm:$0xff]
    %v34 = vld [vmem:[%s1 + $0x40] sm:$0xff]
    %v35 = vld [vmem:[%s1 + $0x48] sm:$0xff]
    %v36 = vld [vmem:[%s1 + $0x50] sm:$0xff]
    %v37 = vld [vmem:[%s1 + $0x58] sm:$0xff]
    %v38 = vld [vmem:[%s1 + $0x60] sm:$0xff]
    %v39 = vld [vmem:[%s1 + $0x68] sm:$0xff]
    %v40 = vld [vmem:[%s1 + $0x70] sm:$0xff]
    %v41 = vld [vmem:[%s1 + $0x78] sm:$0xff]
    %v42 = vld [vmem:[%s1 + $0x80] sm:$0xff]
    %v43 = vld [vmem:[%s1 + $0x88] sm:$0xff]
    %v44 = vld [vmem:[%s1 + $0x90] sm:$0xff]
    %v45 = vld [vmem:[%s1 + $0x98] sm:$0xff]
    %v46 = vld [vmem:[%s1 + $0xa0] sm:$0xff]
    %v47 = vld [vmem:[%s1 + $0xa8] sm:$0xff]
    %v48 = vld [vmem:[%s1 + $0xb0] sm:$0xff]
    %v49 = vld [vmem:[%s1 + $0xb8] sm:$0xff]
    %v50 = vld [vmem:[%s1 + $0xc0] sm:$0xff]
    %v51 = vld [vmem:[%s1 + $0xc8] sm:$0xff]
    %v52 = vld [vmem:[%s1 + $0xd0] sm:$0xff]
    %v53 = vld [vmem:[%s1 + $0xd8] sm:$0xff]
    %v54 = vld [vmem:[%s1 + $0xe0] sm:$0xff]
    %v55 = vld [vmem:[%s1 + $0xe8] sm:$0xff]
    %v56 = vld [vmem:[%s1 + $0xf0] sm:$0xff]
    %v57 = vld [vmem:[%s1 + $0xf8] sm:$0xff]
    %v58 = vld [vmem:[%s2] sm:$0xf]
    %v60 = vlaneseq
    %v61 = vshrl.u32 %v60, 7
    %v62 = vsub.s32 0, %v61
    %v63 = vrot.slane %v58, %v62
    %v64 = vlaneseq
    %v65 = vshrl.u32 %v64, 7
    %v66 = vsub.s32 1, %v65
    %v67 = vrot.slane %v58, %v66
    %v68 = vlaneseq
    %v69 = vshrl.u32 %v68, 7
    %v70 = vsub.s32 2, %v69
    %v71 = vrot.slane %v58, %v70
    %v72 = vlaneseq
    %v73 = vshrl.u32 %v72, 7
    %v74 = vsub.s32 3, %v73
    %v75 = vrot.slane %v58, %v74
    %v84 = vunpack.c.l.b16 %v22
    %v85 = vunpack.c.l.b16 %v23
    %v86 = vunpack.c.l.b16 %v24
    %v87 = vunpack.c.l.b16 %v25
    %v88 = vpack.c.b16 %v85, %v84
    %v89 = vpack.c.b16 %v87, %v86
    %v124 = vunpack.c.l.b16 %v26
    %v125 = vunpack.c.h.b16 %v26
    %v126 = vunpack.c.l.b16 %v27
    %v127 = vunpack.c.h.b16 %v27
    %v128 = vunpack.c.l.b16 %v28
    %v129 = vunpack.c.h.b16 %v28
    %v130 = vunpack.c.l.b16 %v29
    %v131 = vunpack.c.h.b16 %v29
    %v132 = vunpack.c.l.b16 %v30
    %v133 = vunpack.c.h.b16 %v30
    %v134 = vunpack.c.l.b16 %v31
    %v135 = vunpack.c.h.b16 %v31
    %v136 = vunpack.c.l.b16 %v32
    %v137 = vunpack.c.h.b16 %v32
    %v138 = vunpack.c.l.b16 %v33
    %v139 = vunpack.c.h.b16 %v33
    %v140 = vunpack.c.l.b16 %v34
    %v141 = vunpack.c.h.b16 %v34
    %v142 = vunpack.c.l.b16 %v35
    %v143 = vunpack.c.h.b16 %v35
    %v144 = vunpack.c.l.b16 %v36
    %v145 = vunpack.c.h.b16 %v36
    %v146 = vunpack.c.l.b16 %v37
    %v147 = vunpack.c.h.b16 %v37
    %v148 = vunpack.c.l.b16 %v38
    %v149 = vunpack.c.h.b16 %v38
    %v150 = vunpack.c.l.b16 %v39
    %v151 = vunpack.c.h.b16 %v39
    %v152 = vunpack.c.l.b16 %v40
    %v153 = vunpack.c.h.b16 %v40
    %v154 = vunpack.c.l.b16 %v41
    %v155 = vunpack.c.h.b16 %v41
    %v156 = vunpack.c.l.b16 %v42
    %v157 = vunpack.c.h.b16 %v42
    %v158 = vunpack.c.l.b16 %v43
    %v159 = vunpack.c.h.b16 %v43
    %v160 = vunpack.c.l.b16 %v44
    %v161 = vunpack.c.h.b16 %v44
    %v162 = vunpack.c.l.b16 %v45
    %v163 = vunpack.c.h.b16 %v45
    %v164 = vunpack.c.l.b16 %v46
    %v165 = vunpack.c.h.b16 %v46
    %v166 = vunpack.c.l.b16 %v47
    %v167 = vunpack.c.h.b16 %v47
    %v168 = vunpack.c.l.b16 %v48
    %v169 = vunpack.c.h.b16 %v48
    %v170 = vunpack.c.l.b16 %v49
    %v171 = vunpack.c.h.b16 %v49
    %v172 = vunpack.c.l.b16 %v50
    %v173 = vunpack.c.h.b16 %v50
    %v174 = vunpack.c.l.b16 %v51
    %v175 = vunpack.c.h.b16 %v51
    %v176 = vunpack.c.l.b16 %v52
    %v177 = vunpack.c.h.b16 %v52
    %v178 = vunpack.c.l.b16 %v53
    %v179 = vunpack.c.h.b16 %v53
    %v180 = vunpack.c.l.b16 %v54
    %v181 = vunpack.c.h.b16 %v54
    %v182 = vunpack.c.l.b16 %v55
    %v183 = vunpack.c.h.b16 %v55
    %v184 = vunpack.c.l.b16 %v56
    %v185 = vunpack.c.h.b16 %v56
    %v186 = vunpack.c.l.b16 %v57
    %v187 = vunpack.c.h.b16 %v57
    %v188 = vpack.c.b16 %v128, %v124
    %v189 = vpack.c.b16 %v129, %v125
    %v190 = vpack.c.b16 %v130, %v126
    %v191 = vpack.c.b16 %v131, %v127
    %v192 = vpack.c.b16 %v136, %v132
    %v193 = vpack.c.b16 %v137, %v133
    %v194 = vpack.c.b16 %v138, %v134
    %v195 = vpack.c.b16 %v139, %v135
    %v196 = vpack.c.b16 %v144, %v140
    %v197 = vpack.c.b16 %v145, %v141
    %v198 = vpack.c.b16 %v146, %v142
    %v199 = vpack.c.b16 %v147, %v143
    %v200 = vpack.c.b16 %v152, %v148
    %v201 = vpack.c.b16 %v153, %v149
    %v202 = vpack.c.b16 %v154, %v150
    %v203 = vpack.c.b16 %v155, %v151
    %v204 = vpack.c.b16 %v160, %v156
    %v205 = vpack.c.b16 %v161, %v157
    %v206 = vpack.c.b16 %v162, %v158
    %v207 = vpack.c.b16 %v163, %v159
    %v208 = vpack.c.b16 %v168, %v164
    %v209 = vpack.c.b16 %v169, %v165
    %v210 = vpack.c.b16 %v170, %v166
    %v211 = vpack.c.b16 %v171, %v167
    %v212 = vpack.c.b16 %v176, %v172
    %v213 = vpack.c.b16 %v177, %v173
    %v214 = vpack.c.b16 %v178, %v174
    %v215 = vpack.c.b16 %v179, %v175
    %v216 = vpack.c.b16 %v184, %v180
    %v217 = vpack.c.b16 %v185, %v181
    %v218 = vpack.c.b16 %v186, %v182
    %v219 = vpack.c.b16 %v187, %v183
    %252 = vmatprep.subr.bf16.mxu0 %v189
    %253 = vmatpush1.bf16.msra.mxu0 %v188
    %254 = vmatprep.subr.bf16.mxu0 %v193
    %255 = vmatpush1.bf16.msra.mxu0 %v192
    %256 = vmatprep.subr.bf16.mxu0 %v197
    %257 = vmatpush1.bf16.msra.mxu0 %v196
    %258 = vmatprep.subr.bf16.mxu0 %v201
    %259 = vmatpush1.bf16.msra.mxu0 %v200
    %260 = vmatprep.subr.bf16.mxu0 %v205
    %261 = vmatpush1.bf16.msra.mxu0 %v204
    %262 = vmatprep.subr.bf16.mxu0 %v209
    %263 = vmatpush1.bf16.msra.mxu0 %v208
    %264 = vmatprep.subr.bf16.mxu0 %v213
    %265 = vmatpush1.bf16.msra.mxu0 %v212
    %266 = vmatprep.subr.bf16.mxu0 %v217
    %267 = vmatpush1.bf16.msra.mxu0 %v216
    %268 = vmatprep.subr.bf16.mxu0 0
    %269 = vmatpush1.bf16.msra.mxu0 0
    %270 = vmatprep.subr.bf16.mxu0 0
    %271 = vmatpush1.bf16.msra.mxu0 0
    %272 = vmatprep.subr.bf16.mxu0 0
    %273 = vmatpush1.bf16.msra.mxu0 0
    %274 = vmatprep.subr.bf16.mxu0 0
    %275 = vmatpush1.bf16.msra.mxu0 0
    %276 = vmatprep.subr.bf16.mxu0 0
    %277 = vmatpush1.bf16.msra.mxu0 0
    %278 = vmatprep.subr.bf16.mxu0 0
    %279 = vmatpush1.bf16.msra.mxu0 0
    %280 = vmatprep.subr.bf16.mxu0 0
    %281 = vmatpush1.bf16.msra.mxu0 0
    %282 = vmatprep.subr.bf16.mxu0 0
    %283 = vmatpush1.bf16.msra.mxu0 0
    %284 = vmatprep.mubr.bf16.mxu0 0
    %285 = vmatmul.mubr.bf16.gmra.mrb[0].mxu0 %v88
    %v286 = vpop.f32.mrb[0].mxu0
    %v287 = vadd.f32 %v63, %v286
    %v288 = vpop.f32.mrb[0].mxu0
    %v289 = vadd.f32 %v67, %v288
    %v290 = vpop.f32.mrb[0].mxu0
    %v291 = vadd.f32 %v63, %v290
    %v292 = vpop.f32.mrb[0].mxu0
    %v293 = vadd.f32 %v67, %v292
    %294 = vmatprep.mubr.bf16.mxu0 0
    %295 = vmatmul.mubr.bf16.gmra.mrb[0].mxu0 %v89
    %v296 = vpop.f32.mrb[0].mxu0
    %v297 = vadd.f32 %v63, %v296
    %v298 = vpop.f32.mrb[0].mxu0
    %v299 = vadd.f32 %v67, %v298
    %v300 = vpop.f32.mrb[0].mxu0
    %v301 = vadd.f32 %v63, %v300
    %v302 = vpop.f32.mrb[0].mxu0
    %v303 = vadd.f32 %v67, %v302
    %304 = vdwg.mxu0
    %305 = vmatprep.subr.bf16.mxu0 %v191
    %306 = vmatpush1.bf16.msra.mxu0 %v190
    %307 = vmatprep.subr.bf16.mxu0 %v195
    %308 = vmatpush1.bf16.msra.mxu0 %v194
    %309 = vmatprep.subr.bf16.mxu0 %v199
    %310 = vmatpush1.bf16.msra.mxu0 %v198
    %311 = vmatprep.subr.bf16.mxu0 %v203
    %312 = vmatpush1.bf16.msra.mxu0 %v202
    %313 = vmatprep.subr.bf16.mxu0 %v207
    %314 = vmatpush1.bf16.msra.mxu0 %v206
    %315 = vmatprep.subr.bf16.mxu0 %v211
    %316 = vmatpush1.bf16.msra.mxu0 %v210
    %317 = vmatprep.subr.bf16.mxu0 %v215
    %318 = vmatpush1.bf16.msra.mxu0 %v214
    %319 = vmatprep.subr.bf16.mxu0 %v219
    %320 = vmatpush1.bf16.msra.mxu0 %v218
    %321 = vmatprep.subr.bf16.mxu0 0
    %322 = vmatpush1.bf16.msra.mxu0 0
    %323 = vmatprep.subr.bf16.mxu0 0
    %324 = vmatpush1.bf16.msra.mxu0 0
    %325 = vmatprep.subr.bf16.mxu0 0
    %326 = vmatpush1.bf16.msra.mxu0 0
    %327 = vmatprep.subr.bf16.mxu0 0
    %328 = vmatpush1.bf16.msra.mxu0 0
    %329 = vmatprep.subr.bf16.mxu0 0
    %330 = vmatpush1.bf16.msra.mxu0 0
    %331 = vmatprep.subr.bf16.mxu0 0
    %332 = vmatpush1.bf16.msra.mxu0 0
    %333 = vmatprep.subr.bf16.mxu0 0
    %334 = vmatpush1.bf16.msra.mxu0 0
    %335 = vmatprep.subr.bf16.mxu0 0
    %336 = vmatpush1.bf16.msra.mxu0 0
    %337 = vmatprep.mubr.bf16.mxu0 0
    %338 = vmatmul.mubr.bf16.gmra.mrb[0].mxu0 %v88
    %v339 = vpop.f32.mrb[0].mxu0
    %v340 = vadd.f32 %v71, %v339
    %v341 = vpop.f32.mrb[0].mxu0
    %v342 = vadd.f32 %v75, %v341
    %v343 = vpop.f32.mrb[0].mxu0
    %v344 = vadd.f32 %v71, %v343
    %v345 = vpop.f32.mrb[0].mxu0
    %v346 = vadd.f32 %v75, %v345
    %347 = vmatprep.mubr.bf16.mxu0 0
    %348 = vmatmul.mubr.bf16.gmra.mrb[0].mxu0 %v89
    %v349 = vpop.f32.mrb[0].mxu0
    %v350 = vadd.f32 %v71, %v349
    %v351 = vpop.f32.mrb[0].mxu0
    %v352 = vadd.f32 %v75, %v351
    %v353 = vpop.f32.mrb[0].mxu0
    %v354 = vadd.f32 %v71, %v353
    %v355 = vpop.f32.mrb[0].mxu0
    %v356 = vadd.f32 %v75, %v355
    %357 = vdwg.mxu0
    %v358 = vmax.f32 %v287, 0.0
    %v359 = vmax.f32 %v289, 0.0
    %v360 = vmax.f32 %v340, 0.0
    %v361 = vmax.f32 %v342, 0.0
    %v362 = vmax.f32 %v291, 0.0
    %v363 = vmax.f32 %v293, 0.0
    %v364 = vmax.f32 %v344, 0.0
    %v365 = vmax.f32 %v346, 0.0
    %v366 = vmax.f32 %v297, 0.0
    %v367 = vmax.f32 %v299, 0.0
    %v368 = vmax.f32 %v350, 0.0
    %v369 = vmax.f32 %v352, 0.0
    %v370 = vmax.f32 %v301, 0.0
    %v371 = vmax.f32 %v303, 0.0
    %v372 = vmax.f32 %v354, 0.0
    %v373 = vmax.f32 %v356, 0.0
    %v374 = vpack.c.bf16 %v362, %v358
    %v375 = vpack.c.bf16 %v363, %v359
    %v376 = vpack.c.bf16 %v364, %v360
    %v377 = vpack.c.bf16 %v365, %v361
    %v378 = vpack.c.bf16 %v370, %v366
    %v379 = vpack.c.bf16 %v371, %v367
    %v380 = vpack.c.bf16 %v372, %v368
    %v381 = vpack.c.bf16 %v373, %v369
    %v382 = vld [vmem:[%s3] sm:$0xf]
    %v383 = vld [vmem:[%s3 + $0x4] sm:$0xf]
    %v384 = vld [vmem:[%s3 + $0x8] sm:$0xf]
    %v385 = vld [vmem:[%s3 + $0xc] sm:$0xf]
    %v386 = vld [vmem:[%s3 + $0x10] sm:$0xf]
    %v387 = vld [vmem:[%s3 + $0x14] sm:$0xf]
    %v388 = vld [vmem:[%s3 + $0x18] sm:$0xf]
    %v389 = vld [vmem:[%s3 + $0x1c] sm:$0xf]
    %v390 = vld [vmem:[%s3 + $0x20] sm:$0xf]
    %v391 = vld [vmem:[%s3 + $0x24] sm:$0xf]
    %v392 = vld [vmem:[%s3 + $0x28] sm:$0xf]
    %v393 = vld [vmem:[%s3 + $0x2c] sm:$0xf]
    %v394 = vld [vmem:[%s3 + $0x30] sm:$0xf]
    %v395 = vld [vmem:[%s3 + $0x34] sm:$0xf]
    %v396 = vld [vmem:[%s3 + $0x38] sm:$0xf]
    %v397 = vld [vmem:[%s3 + $0x3c] sm:$0xf]
    %v398 = vld [vmem:[%s3 + $0x40] sm:$0xf]
    %v399 = vld [vmem:[%s3 + $0x44] sm:$0xf]
    %v400 = vld [vmem:[%s3 + $0x48] sm:$0xf]
    %v401 = vld [vmem:[%s3 + $0x4c] sm:$0xf]
    %v402 = vld [vmem:[%s3 + $0x50] sm:$0xf]
    %v403 = vld [vmem:[%s3 + $0x54] sm:$0xf]
    %v404 = vld [vmem:[%s3 + $0x58] sm:$0xf]
    %v405 = vld [vmem:[%s3 + $0x5c] sm:$0xf]
    %v406 = vld [vmem:[%s3 + $0x60] sm:$0xf]
    %v407 = vld [vmem:[%s3 + $0x64] sm:$0xf]
    %v408 = vld [vmem:[%s3 + $0x68] sm:$0xf]
    %v409 = vld [vmem:[%s3 + $0x6c] sm:$0xf]
    %v410 = vld [vmem:[%s3 + $0x70] sm:$0xf]
    %v411 = vld [vmem:[%s3 + $0x74] sm:$0xf]
    %v412 = vld [vmem:[%s3 + $0x78] sm:$0xf]
    %v413 = vld [vmem:[%s3 + $0x7c] sm:$0xf]
    %v414 = vld [vmem:[%s3 + $0x80] sm:$0xf]
    %v415 = vld [vmem:[%s3 + $0x84] sm:$0xf]
    %v416 = vld [vmem:[%s3 + $0x88] sm:$0xf]
    %v417 = vld [vmem:[%s3 + $0x8c] sm:$0xf]
    %v418 = vld [vmem:[%s3 + $0x90] sm:$0xf]
    %v419 = vld [vmem:[%s3 + $0x94] sm:$0xf]
    %v420 = vld [vmem:[%s3 + $0x98] sm:$0xf]
    %v421 = vld [vmem:[%s3 + $0x9c] sm:$0xf]
    %v422 = vld [vmem:[%s3 + $0xa0] sm:$0xf]
    %v423 = vld [vmem:[%s3 + $0xa4] sm:$0xf]
    %v424 = vld [vmem:[%s3 + $0xa8] sm:$0xf]
    %v425 = vld [vmem:[%s3 + $0xac] sm:$0xf]
    %v426 = vld [vmem:[%s3 + $0xb0] sm:$0xf]
    %v427 = vld [vmem:[%s3 + $0xb4] sm:$0xf]
    %v428 = vld [vmem:[%s3 + $0xb8] sm:$0xf]
    %v429 = vld [vmem:[%s3 + $0xbc] sm:$0xf]
    %v430 = vld [vmem:[%s3 + $0xc0] sm:$0xf]
    %v431 = vld [vmem:[%s3 + $0xc4] sm:$0xf]
    %v432 = vld [vmem:[%s3 + $0xc8] sm:$0xf]
    %v433 = vld [vmem:[%s3 + $0xcc] sm:$0xf]
    %v434 = vld [vmem:[%s3 + $0xd0] sm:$0xf]
    %v435 = vld [vmem:[%s3 + $0xd4] sm:$0xf]
    %v436 = vld [vmem:[%s3 + $0xd8] sm:$0xf]
    %v437 = vld [vmem:[%s3 + $0xdc] sm:$0xf]
    %v438 = vld [vmem:[%s3 + $0xe0] sm:$0xf]
    %v439 = vld [vmem:[%s3 + $0xe4] sm:$0xf]
    %v440 = vld [vmem:[%s3 + $0xe8] sm:$0xf]
    %v441 = vld [vmem:[%s3 + $0xec] sm:$0xf]
    %v442 = vld [vmem:[%s3 + $0xf0] sm:$0xf]
    %v443 = vld [vmem:[%s3 + $0xf4] sm:$0xf]
    %v444 = vld [vmem:[%s3 + $0xf8] sm:$0xf]
    %v445 = vld [vmem:[%s3 + $0xfc] sm:$0xf]
    %v446 = vld [vmem:[%s4] sm:$0x1]
    %v448 = vlaneseq
    %v449 = vshrl.u32 %v448, 7
    %v450 = vsub.s32 0, %v449
    %v451 = vrot.slane %v446, %v450
    %v517 = vunpack.c.l.b16 %v382
    %v518 = vunpack.c.l.b16 %v383
    %v519 = vunpack.c.l.b16 %v384
    %v520 = vunpack.c.l.b16 %v385
    %v521 = vunpack.c.l.b16 %v386
    %v522 = vunpack.c.l.b16 %v387
    %v523 = vunpack.c.l.b16 %v388
    %v524 = vunpack.c.l.b16 %v389
    %v525 = vunpack.c.l.b16 %v390
    %v526 = vunpack.c.l.b16 %v391
    %v527 = vunpack.c.l.b16 %v392
    %v528 = vunpack.c.l.b16 %v393
    %v529 = vunpack.c.l.b16 %v394
    %v530 = vunpack.c.l.b16 %v395
    %v531 = vunpack.c.l.b16 %v396
    %v532 = vunpack.c.l.b16 %v397
    %v533 = vunpack.c.l.b16 %v398
    %v534 = vunpack.c.l.b16 %v399
    %v535 = vunpack.c.l.b16 %v400
    %v536 = vunpack.c.l.b16 %v401
    %v537 = vunpack.c.l.b16 %v402
    %v538 = vunpack.c.l.b16 %v403
    %v539 = vunpack.c.l.b16 %v404
    %v540 = vunpack.c.l.b16 %v405
    %v541 = vunpack.c.l.b16 %v406
    %v542 = vunpack.c.l.b16 %v407
    %v543 = vunpack.c.l.b16 %v408
    %v544 = vunpack.c.l.b16 %v409
    %v545 = vunpack.c.l.b16 %v410
    %v546 = vunpack.c.l.b16 %v411
    %v547 = vunpack.c.l.b16 %v412
    %v548 = vunpack.c.l.b16 %v413
    %v549 = vunpack.c.l.b16 %v414
    %v550 = vunpack.c.l.b16 %v415
    %v551 = vunpack.c.l.b16 %v416
    %v552 = vunpack.c.l.b16 %v417
    %v553 = vunpack.c.l.b16 %v418
    %v554 = vunpack.c.l.b16 %v419
    %v555 = vunpack.c.l.b16 %v420
    %v556 = vunpack.c.l.b16 %v421
    %v557 = vunpack.c.l.b16 %v422
    %v558 = vunpack.c.l.b16 %v423
    %v559 = vunpack.c.l.b16 %v424
    %v560 = vunpack.c.l.b16 %v425
    %v561 = vunpack.c.l.b16 %v426
    %v562 = vunpack.c.l.b16 %v427
    %v563 = vunpack.c.l.b16 %v428
    %v564 = vunpack.c.l.b16 %v429
    %v565 = vunpack.c.l.b16 %v430
    %v566 = vunpack.c.l.b16 %v431
    %v567 = vunpack.c.l.b16 %v432
    %v568 = vunpack.c.l.b16 %v433
    %v569 = vunpack.c.l.b16 %v434
    %v570 = vunpack.c.l.b16 %v435
    %v571 = vunpack.c.l.b16 %v436
    %v572 = vunpack.c.l.b16 %v437
    %v573 = vunpack.c.l.b16 %v438
    %v574 = vunpack.c.l.b16 %v439
    %v575 = vunpack.c.l.b16 %v440
    %v576 = vunpack.c.l.b16 %v441
    %v577 = vunpack.c.l.b16 %v442
    %v578 = vunpack.c.l.b16 %v443
    %v579 = vunpack.c.l.b16 %v444
    %v580 = vunpack.c.l.b16 %v445
    %v581 = vpack.c.b16 %v518, %v517
    %v582 = vpack.c.b16 %v520, %v519
    %v583 = vpack.c.b16 %v522, %v521
    %v584 = vpack.c.b16 %v524, %v523
    %v585 = vpack.c.b16 %v526, %v525
    %v586 = vpack.c.b16 %v528, %v527
    %v587 = vpack.c.b16 %v530, %v529
    %v588 = vpack.c.b16 %v532, %v531
    %v589 = vpack.c.b16 %v534, %v533
    %v590 = vpack.c.b16 %v536, %v535
    %v591 = vpack.c.b16 %v538, %v537
    %v592 = vpack.c.b16 %v540, %v539
    %v593 = vpack.c.b16 %v542, %v541
    %v594 = vpack.c.b16 %v544, %v543
    %v595 = vpack.c.b16 %v546, %v545
    %v596 = vpack.c.b16 %v548, %v547
    %v597 = vpack.c.b16 %v550, %v549
    %v598 = vpack.c.b16 %v552, %v551
    %v599 = vpack.c.b16 %v554, %v553
    %v600 = vpack.c.b16 %v556, %v555
    %v601 = vpack.c.b16 %v558, %v557
    %v602 = vpack.c.b16 %v560, %v559
    %v603 = vpack.c.b16 %v562, %v561
    %v604 = vpack.c.b16 %v564, %v563
    %v605 = vpack.c.b16 %v566, %v565
    %v606 = vpack.c.b16 %v568, %v567
    %v607 = vpack.c.b16 %v570, %v569
    %v608 = vpack.c.b16 %v572, %v571
    %v609 = vpack.c.b16 %v574, %v573
    %v610 = vpack.c.b16 %v576, %v575
    %v611 = vpack.c.b16 %v578, %v577
    %v612 = vpack.c.b16 %v580, %v579
    %645 = vmatprep.subr.bf16.mxu0 0
    %646 = vmatpush1.bf16.msra.mxu0 %v581
    %647 = vmatprep.subr.bf16.mxu0 0
    %648 = vmatpush1.bf16.msra.mxu0 %v582
    %649 = vmatprep.subr.bf16.mxu0 0
    %650 = vmatpush1.bf16.msra.mxu0 %v583
    %651 = vmatprep.subr.bf16.mxu0 0
    %652 = vmatpush1.bf16.msra.mxu0 %v584
    %653 = vmatprep.subr.bf16.mxu0 0
    %654 = vmatpush1.bf16.msra.mxu0 %v585
    %655 = vmatprep.subr.bf16.mxu0 0
    %656 = vmatpush1.bf16.msra.mxu0 %v586
    %657 = vmatprep.subr.bf16.mxu0 0
    %658 = vmatpush1.bf16.msra.mxu0 %v587
    %659 = vmatprep.subr.bf16.mxu0 0
    %660 = vmatpush1.bf16.msra.mxu0 %v588
    %661 = vmatprep.subr.bf16.mxu0 0
    %662 = vmatpush1.bf16.msra.mxu0 %v589
    %663 = vmatprep.subr.bf16.mxu0 0
    %664 = vmatpush1.bf16.msra.mxu0 %v590
    %665 = vmatprep.subr.bf16.mxu0 0
    %666 = vmatpush1.bf16.msra.mxu0 %v591
    %667 = vmatprep.subr.bf16.mxu0 0
    %668 = vmatpush1.bf16.msra.mxu0 %v592
    %669 = vmatprep.subr.bf16.mxu0 0
    %670 = vmatpush1.bf16.msra.mxu0 %v593
    %671 = vmatprep.subr.bf16.mxu0 0
    %672 = vmatpush1.bf16.msra.mxu0 %v594
    %673 = vmatprep.subr.bf16.mxu0 0
    %674 = vmatpush1.bf16.msra.mxu0 %v595
    %675 = vmatprep.subr.bf16.mxu0 0
    %676 = vmatpush1.bf16.msra.mxu0 %v596
    %677 = vmatprep.mubr.bf16.mxu0 %v375
    %678 = vmatmul.mubr.bf16.gmra.mrb[0].mxu0 %v374
    %v679 = vpop.f32.mrb[0].mxu0
    %v680 = vadd.f32 %v451, %v679
    %v681 = vpop.f32.mrb[0].mxu0
    %v682 = vpop.f32.mrb[0].mxu0
    %v683 = vadd.f32 %v451, %v682
    %v684 = vpop.f32.mrb[0].mxu0
    %685 = vmatprep.mubr.bf16.mxu0 %v379
    %686 = vmatmul.mubr.bf16.gmra.mrb[0].mxu0 %v378
    %v687 = vpop.f32.mrb[0].mxu0
    %v688 = vadd.f32 %v451, %v687
    %v689 = vpop.f32.mrb[0].mxu0
    %v690 = vpop.f32.mrb[0].mxu0
    %v691 = vadd.f32 %v451, %v690
    %v692 = vpop.f32.mrb[0].mxu0
    %693 = vdwg.mxu0
    %694 = vmatprep.subr.bf16.mxu0 0
    %695 = vmatpush1.bf16.msra.mxu0 %v597
    %696 = vmatprep.subr.bf16.mxu0 0
    %697 = vmatpush1.bf16.msra.mxu0 %v598
    %698 = vmatprep.subr.bf16.mxu0 0
    %699 = vmatpush1.bf16.msra.mxu0 %v599
    %700 = vmatprep.subr.bf16.mxu0 0
    %701 = vmatpush1.bf16.msra.mxu0 %v600
    %702 = vmatprep.subr.bf16.mxu0 0
    %703 = vmatpush1.bf16.msra.mxu0 %v601
    %704 = vmatprep.subr.bf16.mxu0 0
    %705 = vmatpush1.bf16.msra.mxu0 %v602
    %706 = vmatprep.subr.bf16.mxu0 0
    %707 = vmatpush1.bf16.msra.mxu0 %v603
    %708 = vmatprep.subr.bf16.mxu0 0
    %709 = vmatpush1.bf16.msra.mxu0 %v604
    %710 = vmatprep.subr.bf16.mxu0 0
    %711 = vmatpush1.bf16.msra.mxu0 %v605
    %712 = vmatprep.subr.bf16.mxu0 0
    %713 = vmatpush1.bf16.msra.mxu0 %v606
    %714 = vmatprep.subr.bf16.mxu0 0
    %715 = vmatpush1.bf16.msra.mxu0 %v607
    %716 = vmatprep.subr.bf16.mxu0 0
    %717 = vmatpush1.bf16.msra.mxu0 %v608
    %718 = vmatprep.subr.bf16.mxu0 0
    %719 = vmatpush1.bf16.msra.mxu0 %v609
    %720 = vmatprep.subr.bf16.mxu0 0
    %721 = vmatpush1.bf16.msra.mxu0 %v610
    %722 = vmatprep.subr.bf16.mxu0 0
    %723 = vmatpush1.bf16.msra.mxu0 %v611
    %724 = vmatprep.subr.bf16.mxu0 0
    %725 = vmatpush1.bf16.msra.mxu0 %v612
    %726 = vmatprep.mubr.bf16.mxu0 %v377
    %727 = vmatmul.mubr.bf16.gmra.mrb[0].mxu0 %v376
    %v728 = vpop.f32.mrb[0].mxu0
    %v729 = vadd.f32 %v680, %v728
    %v730 = vpop.f32.mrb[0].mxu0
    %v731 = vpop.f32.mrb[0].mxu0
    %v732 = vadd.f32 %v683, %v731
    %v733 = vpop.f32.mrb[0].mxu0
    %734 = vmatprep.mubr.bf16.mxu0 %v381
    %735 = vmatmul.mubr.bf16.gmra.mrb[0].mxu0 %v380
    %v736 = vpop.f32.mrb[0].mxu0
    %v737 = vadd.f32 %v688, %v736
    %v738 = vpop.f32.mrb[0].mxu0
    %v739 = vpop.f32.mrb[0].mxu0
    %v740 = vadd.f32 %v691, %v739
    %v741 = vpop.f32.mrb[0].mxu0
    %742 = vdwg.mxu0
    %743 = vst [vmem:[#allocation2] sm:$0xff] %v729
    %744 = vst [vmem:[#allocation2 + $0x8] sm:$0xff] %v732
    %745 = vst [vmem:[#allocation2 + $0x10] sm:$0xff] %v737
    %746 = vst [vmem:[#allocation2 + $0x18] sm:$0xff] %v740
    // Predicated region
    $region22: #{positionwise_ffn.1} parent=1 // pred_check
      _
    $region23: #{positionwise_ffn.1} parent=1 // pred_check_branch
      %748 = sbr.rel (0) target = $region25
    $region24: #{positionwise_ffn.1} parent=1 // pred_region
      %s750 = ssub.s32 512, 512
      %751 = vsyncadd [#allocation3], %s750
      %s752 = sshll.u32 [#allocation2], 4
      %s753 = int_to_ptr.vmem [resolvable:$true] %s752
      %758 = dma.vmem_to_hbm [thread:$0]  %s753, 512, %s5, [#allocation3], 128, 128, 8
    $region25: #{positionwise_ffn.1} parent=1 // pred_fallthru
      _
    // Predicated region
    $region26: #{positionwise_ffn.1} parent=1 // pred_check
      _
    $region27: #{positionwise_ffn.1} parent=1 // pred_check_branch
      %760 = sbr.rel (0) target = $region29
    $region28: #{positionwise_ffn.1} parent=1 // pred_region
      %761 = dma.done [#allocation3], 512
    $region29: #{positionwise_ffn.1} parent=1 // pred_fallthru
      _
    %762 = vsyncpa [#allocation3], 1

</llo_original>
